<compile_context>
chip_gen: v7x
topology: tpu7x:2x2x1
jax: 0.10.0
libtpu: 0.0.40
codegen_flags: <defaults>
</compile_context>

<pallas_src>
import functools

import jax
import jax.numpy as jnp
from jax import lax
from jax.experimental import pallas as pl
from jax.experimental.pallas import tpu as pltpu


def _layernorm_kernel(x_ref, w_ref, b_ref, o_ref, *, eps: float, n_valid: int):
    # x_ref: [tile_rows, hidden]; w_ref/b_ref: [1, hidden].
    inv_n = 1.0 / n_valid
    # TODO(synk): torch.std is NaN for hidden_size == 1 (unbiased N-1); we guard the trace-time
    # division instead of reproducing the NaN.
    inv_nm1 = 1.0 / max(n_valid - 1, 1)

    # Pass 1: row mean.  The upcast happens inside the reduction (no full-tile f32 temp kept
    # live across phases -> lower vreg/VMEM pressure for large tiles).
    mu = jnp.sum(x_ref[...].astype(jnp.float32), axis=-1, keepdims=True) * inv_n

    # Pass 2: unbiased (N-1) variance, two-pass for f32 accuracy (no catastrophic cancellation
    # when |mean| >> std).  Still HBM-bound, so the extra elementwise pass is hidden.
    diff = x_ref[...].astype(jnp.float32) - mu
    var = jnp.sum(diff * diff, axis=-1, keepdims=True) * inv_nm1

    # clamp(std, eps) then divide  ==  min(rsqrt(var), 1/eps)  for var >= 0.
    # EUP op on a [tile_rows, 1] column -> essentially free.
    inv_sigma = jnp.minimum(lax.rsqrt(var), 1.0 / eps)

    w = w_ref[...].astype(jnp.float32)
    b = b_ref[...].astype(jnp.float32)
    # Re-index x_ref for the normalize phase instead of reusing the f32 temp.
    o_ref[...] = ((x_ref[...].astype(jnp.float32) - mu) * inv_sigma * w + b).astype(o_ref.dtype)


def _round_up(x: int, m: int) -> int:
    return ((x + m - 1) // m) * m


def _device_budget():
    """(target block bytes (f32), vmem_limit_bytes, min grid steps) — generation aware."""
    vmem = None
    try:
        info = pltpu.get_tpu_info()
        vmem = getattr(info, "vmem_capacity_bytes", None) or getattr(info, "vmem_size_bytes", None)
    except Exception:
        vmem = None
    if vmem is None or vmem <= (64 << 20):
        # v7x (64 MiB VMEM per TC, 2 TCs) or unknown: conservative blocks, >=2 steps per core.
        return 2 << 20, 48 << 20, 4
    # v5e / v6e: 128 MiB physical VMEM, single TC -> bigger blocks, only need pipelining depth.
    return 8 << 20, 64 << 20, 2


def _choose_tile_rows(rows: int, hidden: int, *, target_bytes: int, min_grid: int,
                      max_rows: int = 2048, min_block_bytes: int = 1 << 20) -> int:
    """Row tile: ~target_bytes of f32 working set, multiple of 16 (dense sublane packing for
    f32 and bf16), never larger than the (rounded-up) input, and split further so the grid has
    >= min_grid steps while each block stays >= ~1 MiB."""
    row_bytes = hidden * 4                      # budget by the f32 working set, not input dtype
    tr = target_bytes // max(1, row_bytes)
    tr = max(16, min(max_rows, (tr // 16) * 16))
    tr = min(tr, _round_up(rows, 16))           # at most one partial block past the real rows
    while (tr > 16 and pl.cdiv(rows, tr) < min_grid
           and (tr // 2) * row_bytes >= min_block_bytes):
        tr = max(16, _round_up(tr // 2, 16))
    return tr


def layer_norm(x, weight, bias, eps: float = 1e-6, tile_rows=None):
    """LayerNorm over the last axis of `x` (any rank >= 1), matching the torch module:
    (x - mean) / std.clamp(min=eps) * weight + bias, with unbiased (N-1) std."""
    orig_shape = x.shape
    hidden = orig_shape[-1]
    rows = 1
    for d in orig_shape[:-1]:
        rows *= d

    x2d = x.reshape(rows, hidden)
    w2d = weight.reshape(1, hidden)
    b2d = bias.reshape(1, hidden)

    target_bytes, vmem_limit, min_grid = _device_budget()
    tr = tile_rows if tile_rows is not None else _choose_tile_rows(
        rows, hidden, target_bytes=target_bytes, min_grid=min_grid)

    grid = (pl.cdiv(rows, tr),)   # last block may be partial: garbage rows stay per-row,
                                  # their writes are clipped -> no pad / no output slice.

    out = pl.pallas_call(
        functools.partial(_layernorm_kernel, eps=eps, n_valid=hidden),
        out_shape=jax.ShapeDtypeStruct((rows, hidden), x.dtype),
        grid_spec=pltpu.PrefetchScalarGridSpec(
            num_scalar_prefetch=0,
            grid=grid,
            in_specs=[
                pl.BlockSpec((tr, hidden), lambda i: (i, 0)),   # full hidden dim per block
                pl.BlockSpec((1, hidden), lambda i: (0, 0)),
                pl.BlockSpec((1, hidden), lambda i: (0, 0)),
            ],
            out_specs=pl.BlockSpec((tr, hidden), lambda i: (i, 0)),
        ),
        compiler_params=pltpu.CompilerParams(
            dimension_semantics=("parallel",),
            vmem_limit_bytes=vmem_limit,
        ),
    )(x2d, w2d, b2d)

    return out.reshape(orig_shape)


def layer_norm_ref(x, weight, bias, eps=1e-6):
    x32 = x.astype(jnp.float32)
    n = x.shape[-1]
    mu = jnp.mean(x32, axis=-1, keepdims=True)
    var = jnp.sum((x32 - mu) ** 2, axis=-1, keepdims=True) / max(n - 1, 1)
    sigma = jnp.maximum(jnp.sqrt(var), eps)
    return ((x32 - mu) / sigma * weight + bias).astype(x.dtype)


if __name__ == "__main__":
    key = jax.random.PRNGKey(0)
    batch, seq, hidden = 2, 8, 32

    x = jax.random.normal(key, (batch, seq, hidden), dtype=jnp.float32)

    # deterministic parameter init matching nn.Parameter(torch.ones/zeros(hidden_size))
    weight = jnp.ones((hidden,), dtype=jnp.float32)
    bias = jnp.zeros((hidden,), dtype=jnp.float32)

    out = layer_norm(x, weight, bias, eps=1e-6)
    out = jax.block_until_ready(out)

    ref = layer_norm_ref(x, weight, bias, eps=1e-6)
    assert out.shape == x.shape
    assert jnp.allclose(out, ref, atol=1e-4, rtol=1e-4), "mismatch vs reference"

    print("KERNEL_OK")
</pallas_src>

<mosaic_0001>
module attributes {stable_mosaic.version = 11 : i64} {
  func.func @_layernorm_kernel(%arg0: i32, %arg1: memref<16x32xf32, #tpu.memory_space<vmem>>, %arg2: memref<1x32xf32, #tpu.memory_space<vmem>>, %arg3: memref<1x32xf32, #tpu.memory_space<vmem>>, %arg4: memref<16x32xf32, #tpu.memory_space<vmem>>) attributes {dimension_semantics = [#tpu.dimension_semantics<parallel>], iteration_bounds = array<i64: 1>, scalar_prefetch = 0 : i64, scratch_operands = 0 : i64, tpu.core_type = #tpu.core_type<tc>, window_params = [{transform_indices = @transform_0, window_bounds = array<i64: 16, 32>}, {pipeline_mode = #tpu.pipeline_mode<synchronous>, transform_indices = @transform_1, window_bounds = array<i64: 1, 32>}, {pipeline_mode = #tpu.pipeline_mode<synchronous>, transform_indices = @transform_2, window_bounds = array<i64: 1, 32>}, {transform_indices = @transform_3, window_bounds = array<i64: 16, 32>}]} {
    %c0 = arith.constant 0 : index
    %c0_0 = arith.constant 0 : index
    %0 = vector.load %arg1[%c0, %c0_0] : memref<16x32xf32, #tpu.memory_space<vmem>>, vector<16x32xf32>
    %cst = arith.constant dense<0.000000e+00> : vector<16xf32>
    %1 = vector.multi_reduction <add>, %0, %cst [1] : vector<16x32xf32> to vector<16xf32>
    %2 = vector.shape_cast %1 : vector<16xf32> to vector<16x1xf32>
    %cst_1 = arith.constant 3.125000e-02 : f32
    %3 = vector.broadcast %cst_1 : f32 to vector<16x1xf32>
    %4 = arith.mulf %2, %3 : vector<16x1xf32>
    %c0_2 = arith.constant 0 : index
    %c0_3 = arith.constant 0 : index
    %5 = vector.load %arg1[%c0_2, %c0_3] : memref<16x32xf32, #tpu.memory_space<vmem>>, vector<16x32xf32>
    %6 = vector.broadcast %4 : vector<16x1xf32> to vector<16x32xf32>
    %7 = arith.subf %5, %6 : vector<16x32xf32>
    %8 = arith.mulf %7, %7 : vector<16x32xf32>
    %cst_4 = arith.constant dense<0.000000e+00> : vector<16xf32>
    %9 = vector.multi_reduction <add>, %8, %cst_4 [1] : vector<16x32xf32> to vector<16xf32>
    %10 = vector.shape_cast %9 : vector<16xf32> to vector<16x1xf32>
    %cst_5 = arith.constant 0.0322580636 : f32
    %11 = vector.broadcast %cst_5 : f32 to vector<16x1xf32>
    %12 = arith.mulf %10, %11 : vector<16x1xf32>
    %13 = math.rsqrt %12 : vector<16x1xf32>
    %cst_6 = arith.constant 1.000000e+06 : f32
    %14 = vector.broadcast %cst_6 : f32 to vector<16x1xf32>
    %15 = arith.minimumf %13, %14 : vector<16x1xf32>
    %c0_7 = arith.constant 0 : index
    %c0_8 = arith.constant 0 : index
    %16 = vector.load %arg2[%c0_7, %c0_8] : memref<1x32xf32, #tpu.memory_space<vmem>>, vector<1x32xf32>
    %c0_9 = arith.constant 0 : index
    %c0_10 = arith.constant 0 : index
    %17 = vector.load %arg3[%c0_9, %c0_10] : memref<1x32xf32, #tpu.memory_space<vmem>>, vector<1x32xf32>
    %c0_11 = arith.constant 0 : index
    %c0_12 = arith.constant 0 : index
    %18 = vector.load %arg1[%c0_11, %c0_12] : memref<16x32xf32, #tpu.memory_space<vmem>>, vector<16x32xf32>
    %19 = vector.broadcast %4 : vector<16x1xf32> to vector<16x32xf32>
    %20 = arith.subf %18, %19 : vector<16x32xf32>
    %21 = vector.broadcast %15 : vector<16x1xf32> to vector<16x32xf32>
    %22 = arith.mulf %20, %21 : vector<16x32xf32>
    %23 = vector.broadcast %16 : vector<1x32xf32> to vector<16x32xf32>
    %24 = arith.mulf %22, %23 : vector<16x32xf32>
    %25 = vector.broadcast %17 : vector<1x32xf32> to vector<16x32xf32>
    %26 = arith.addf %24, %25 : vector<16x32xf32>
    %c0_13 = arith.constant 0 : index
    %c0_14 = arith.constant 0 : index
    %27 = vector.load %arg4[%c0_13, %c0_14] : memref<16x32xf32, #tpu.memory_space<vmem>>, vector<16x32xf32>
    tpu.vector_store %arg4[%c0_13, %c0_14], %26 {strides = array<i32>} : memref<16x32xf32, #tpu.memory_space<vmem>>, vector<16x32xf32>,
    return
  }
  func.func @transform_0(%arg0: i32) -> (i32, i32) {
    %c0_i32 = arith.constant 0 : i32
    %c0_i32_0 = arith.constant 0 : i32
    return %arg0, %c0_i32 : i32, i32
  }
  func.func @transform_1(%arg0: i32) -> (i32, i32) {
    %c0_i32 = arith.constant 0 : i32
    %c0_i32_0 = arith.constant 0 : i32
    %c0_i32_1 = arith.constant 0 : i32
    return %c0_i32, %c0_i32_0 : i32, i32
  }
  func.func @transform_2(%arg0: i32) -> (i32, i32) {
    %c0_i32 = arith.constant 0 : i32
    %c0_i32_0 = arith.constant 0 : i32
    %c0_i32_1 = arith.constant 0 : i32
    return %c0_i32, %c0_i32_0 : i32, i32
  }
  func.func @transform_3(%arg0: i32) -> (i32, i32) {
    %c0_i32 = arith.constant 0 : i32
    %c0_i32_0 = arith.constant 0 : i32
    return %arg0, %c0_i32 : i32, i32
  }
}

</mosaic_0001>

<llo_original>
// kernel: tpu_custom_call.1
$region0: #{tpu_custom_call.1}
  #allocation0 [shape = 'u32[]', space=smem, size = 0x4, offset = 0x4, fixed_abs, tag = 'smem constant byte address 0x4 - core index']
  #allocation1 [shape = 'u32[144,128]{1,0:T(1,128)}', space=vmem, size = 0x12000, scoped, tag = 'internal scratch']
  %s0 = inlined_call_operand.hbm [shape: f32[16,32], index: 0, kind: input, shape index: {}]
  %s1 = inlined_call_operand.vmem [shape: f32[1,32], index: 1, kind: input, shape index: {}]
  %s2 = inlined_call_operand.vmem [shape: f32[1,32], index: 2, kind: input, shape index: {}]
  %s3 = inlined_call_operand.hbm [shape: f32[16,32], index: 3, kind: output, shape index: {}]
  %s4 = sld [smem:[#allocation0]]
  $region26: #{tpu_custom_call.1} parent=0
    _
  %s6 = ssub.s32 1, %s4
  %s7 = scalar_select 0, %s6, %s4
  $region1: #{tpu_custom_call.1} parent=0
    #allocation2 [shape = 'u8[8192]{0}', space=vmem, size = 0x2000, scoped, tag = 'input window, operand 0, single buffered']
    #allocation3 [shape = 's32[1]{0}', space=sflag, size = 0x4, scoped, tag = 'scoped memory for tpu_custom_call.1']
    #allocation4 [shape = 's32[1]{0}', space=sflag, size = 0x4, scoped, tag = 'scoped memory for tpu_custom_call.1']
    #allocation5 [shape = 'u8[8192]{0}', space=vmem, size = 0x2000, scoped, tag = 'output window, operand 0, single buffered']
    %8 = vsyncpa [#allocation3], 0
    %9 = vsyncpa [#allocation4], 0
    // Predicated region
    $region2: #{tpu_custom_call.1} parent=1 // pred_check
      _
    $region3: #{tpu_custom_call.1} parent=1 // pred_check_branch
      %11 = sbr.rel (0) target = $region5
    $region4: #{tpu_custom_call.1} parent=1 // pred_region
      %s13 = ssub.s32 256, 256
      %14 = vsyncadd [#allocation3], %s13
      %s15 = sshll.u32 [#allocation2], 4
      %s16 = int_to_ptr.vmem [resolvable:$true] %s15
      %21 = dma.hbm_to_vmem [thread:$0]  %s0, 256, %s16, [#allocation3], 128, 128, 8
    $region5: #{tpu_custom_call.1} parent=1 // pred_fallthru
      _
    // Predicated region
    $region6: #{tpu_custom_call.1} parent=1 // pred_check
      _
    $region7: #{tpu_custom_call.1} parent=1 // pred_check_branch
      %23 = sbr.rel (0) target = $region9
    $region8: #{tpu_custom_call.1} parent=1 // pred_region
      _
    $region9: #{tpu_custom_call.1} parent=1 // pred_fallthru
      _
    // Predicated region
    $region10: #{tpu_custom_call.1} parent=1 // pred_check
      _
    $region11: #{tpu_custom_call.1} parent=1 // pred_check_branch
      %25 = sbr.rel (0) target = $region13
    $region12: #{tpu_custom_call.1} parent=1 // pred_region
      _
    $region13: #{tpu_custom_call.1} parent=1 // pred_fallthru
      _
    // Predicated region
    $region14: #{tpu_custom_call.1} parent=1 // pred_check
      _
    $region15: #{tpu_custom_call.1} parent=1 // pred_check_branch
      %27 = sbr.rel (0) target = $region17
    $region16: #{tpu_custom_call.1} parent=1 // pred_region
      %28 = dma.done [#allocation3], 256
    $region17: #{tpu_custom_call.1} parent=1 // pred_fallthru
      _
    %v29 = vld [vmem:[#allocation2] sm:$0xff]
    %v30 = vld [vmem:[#allocation2 + $0x8] sm:$0xff]
    %vm31 = vcmask 261120
    %v32 = vsel %vm31, %v29, 0.0
    %33 = vadd.xlane.f32.xlu0 %v32
    %v34 = vpop.xlane.xlu0 %33
    %v35 = vsel %vm31, %v30, 0.0
    %36 = vadd.xlane.f32.xlu0 %v35
    %v37 = vpop.xlane.xlu0 %36
    %v38 = vmul.f32 %v34, 0.03125
    %v39 = vmul.f32 %v37, 0.03125
    %v40 = vsub.f32 %v29, %v38
    %v41 = vsub.f32 %v30, %v39
    %v42 = vmul.f32 %v40, %v40
    %v43 = vmul.f32 %v41, %v41
    %v44 = vsel %vm31, %v42, 0.0
    %45 = vadd.xlane.f32.xlu0 %v44
    %v46 = vpop.xlane.xlu0 %45
    %v47 = vsel %vm31, %v43, 0.0
    %48 = vadd.xlane.f32.xlu0 %v47
    %v49 = vpop.xlane.xlu0 %48
    %v50 = vmul.f32 %v46, 0.032258064
    %v51 = vmul.f32 %v49, 0.032258064
    %v52 = vrsqrt.pop %v50
    %v53 = vrsqrt.pop %v51
    %v54 = vmin.f32 %v52, 1000000.0
    %v55 = vmin.f32 %v53, 1000000.0
    %v56 = vld [vmem:[%s1] sm:$0x1]
    %v57 = vld [vmem:[%s2] sm:$0x1]
    %v58 = vmul.f32 %v40, %v54
    %v59 = vmul.f32 %v41, %v55
    %v61 = vlaneseq
    %v62 = vshrl.u32 %v61, 7
    %v63 = vsub.s32 0, %v62
    %v64 = vrot.slane %v56, %v63
    %v66 = vmul.f32 %v58, %v64
    %v67 = vmul.f32 %v59, %v64
    %v69 = vlaneseq
    %v70 = vshrl.u32 %v69, 7
    %v71 = vsub.s32 0, %v70
    %v72 = vrot.slane %v57, %v71
    %v74 = vadd.f32 %v66, %v72
    %v75 = vadd.f32 %v67, %v72
    %76 = vst.msk [vmem:[#allocation5] sm:$0xff] %vm31, %v74
    %77 = vst.msk [vmem:[#allocation5 + $0x8] sm:$0xff] %vm31, %v75
    // Predicated region
    $region18: #{tpu_custom_call.1} parent=1 // pred_check
      _
    $region19: #{tpu_custom_call.1} parent=1 // pred_check_branch
      %79 = sbr.rel (0) target = $region21
    $region20: #{tpu_custom_call.1} parent=1 // pred_region
      %s81 = ssub.s32 256, 256
      %82 = vsyncadd [#allocation4], %s81
      %s83 = sshll.u32 [#allocation5], 4
      %s84 = int_to_ptr.vmem [resolvable:$true] %s83
      %89 = dma.vmem_to_hbm [thread:$0]  %s84, 256, %s3, [#allocation4], 128, 128, 8
    $region21: #{tpu_custom_call.1} parent=1 // pred_fallthru
      _
    // Predicated region
    $region22: #{tpu_custom_call.1} parent=1 // pred_check
      _
    $region23: #{tpu_custom_call.1} parent=1 // pred_check_branch
      %91 = sbr.rel (0) target = $region25
    $region24: #{tpu_custom_call.1} parent=1 // pred_region
      %92 = dma.done [#allocation4], 256
    $region25: #{tpu_custom_call.1} parent=1 // pred_fallthru
      _
    %93 = vsyncpa [#allocation3], 1
    %94 = vsyncpa [#allocation4], 1

</llo_original>
